<compile_context>
chip_gen: v7x
topology: tpu7x:2x2x1
jax: 0.10.0
libtpu: 0.0.40
codegen_flags: <defaults>
</compile_context>

<pallas_src>
import functools

import jax
import jax.numpy as jnp
from jax.experimental import pallas as pl
from jax.experimental.pallas import tpu as pltpu

ALPHA = 0.25   # deterministic "parameter" init, matching nn.Module __init__
GAMMA = 2
_LANES = 128


def _focal_loss_kernel(x_ref, t_ref, out_ref, *, alpha, gamma, n_total,
                       tile_rows, needs_mask):
    x = x_ref[...].astype(jnp.float32)
    t = t_ref[...].astype(jnp.float32)

    # Numerically stable BCE-with-logits (same formula PyTorch uses):
    #   max(x, 0) - x*t + log1p(exp(-|x|))
    e = jnp.exp(-jnp.abs(x))
    bce = jnp.maximum(x, 0.0) - x * t + jnp.log1p(e)

    # pt = exp(-BCE). For binary {0,1} targets this is the probability of the
    # true class: pt = sigmoid(z), z = x if t==1 else -x, and
    #   sigmoid(z) = (1 if z >= 0 else e) / (1 + e),  e = exp(-|z|) = exp(-|x|)
    # This reuses `e` and avoids a second EUP exp.
    z = jnp.where(t > 0.5, x, -x)
    num = jnp.where(z >= 0.0, 1.0, e)
    pt = num * pl.reciprocal(1.0 + e, approx=True)

    # alpha_vec.gather(0, targets.long()) for binary targets, as pure VALU math:
    # t==0 -> alpha, t==1 -> 1-alpha.
    at = alpha + (1.0 - 2.0 * alpha) * t

    omp = 1.0 - pt
    if isinstance(gamma, (int, float)) and float(gamma) == int(gamma):
        gi = int(gamma)
        mod = omp * omp if gi == 2 else jax.lax.integer_pow(omp, gi)
    else:
        # TODO(synk): non-integer gamma falls back to the exp/log pow path.
        mod = omp ** gamma
    f_loss = at * mod * bce

    if needs_mask:
        # Zero out lanes past the logical length (array pad and/or block pad).
        i = pl.program_id(0)
        row = jax.lax.broadcasted_iota(jnp.int32, f_loss.shape, 0)
        col = jax.lax.broadcasted_iota(jnp.int32, f_loss.shape, 1)
        flat = (i * tile_rows + row) * _LANES + col
        f_loss = jnp.where(flat < n_total, f_loss, 0.0)

    # Per-lane partial sums for this tile; the scalar reduce happens outside.
    out_ref[...] = jnp.sum(f_loss, axis=0)[None, None, :]


def _pick_tile_rows(rows, itemsizes, max_tile_rows=None):
    """Biggest lane-dense row tile that keeps 2 streams x 2 pipeline buffers at
    ~4 MiB total -- comfortably inside every generation's scoped-VMEM default
    (16 MiB v5e, 32 MiB v6e/v7x; v7x physical VMEM is only 64 MiB)."""
    if max_tile_rows is None:
        budget_per_buffer = 1 << 20                        # ~1 MiB / stream / buffer
        max_tile_rows = max(8, budget_per_buffer // (_LANES * max(itemsizes)))
    tile_rows = min(rows, max_tile_rows)
    if tile_rows < rows:
        # Not a full-extent block -> keep it sublane-tile aligned for the
        # narrowest dtype streamed (8 rows f32, 16 bf16, 32 int8).
        sub = max(32 // its for its in itemsizes)
        tile_rows = max(sub, (tile_rows // sub) * sub)
    return tile_rows


def weighted_focal_loss(inputs, targets, alpha=ALPHA, gamma=GAMMA,
                        max_tile_rows=None):
    """Mean weighted focal loss over all elements.

    Assumes binary {0,1} targets (matching the PyTorch module's
    alpha_vec.gather(0, targets.long()) usage)."""
    assert inputs.shape == targets.shape
    n_total = int(inputs.size)

    x = inputs.reshape(-1)
    t = targets.reshape(-1)

    padded = pl.cdiv(n_total, _LANES) * _LANES
    if padded != n_total:
        # Tiny (<128 element) pad so the lane-dense reshape works; the padded
        # tail is masked out inside the kernel.
        x = jnp.pad(x, (0, padded - n_total))
        t = jnp.pad(t, (0, padded - n_total))
    rows = padded // _LANES

    # Stream native dtypes (no f32 upcast copy in HBM); the kernel casts in VMEM.
    x2 = x.reshape(rows, _LANES)
    t2 = t.reshape(rows, _LANES)

    itemsizes = (jnp.dtype(x2.dtype).itemsize, jnp.dtype(t2.dtype).itemsize)
    tile_rows = _pick_tile_rows(rows, itemsizes, max_tile_rows)
    num_tiles = pl.cdiv(rows, tile_rows)
    needs_mask = (rows % tile_rows != 0) or (padded != n_total)

    kernel = functools.partial(
        _focal_loss_kernel, alpha=float(alpha), gamma=gamma, n_total=n_total,
        tile_rows=tile_rows, needs_mask=needs_mask)

    partials = pl.pallas_call(
        kernel,
        out_shape=jax.ShapeDtypeStruct((num_tiles, 1, _LANES), jnp.float32),
        grid=(num_tiles,),
        in_specs=[
            pl.BlockSpec((tile_rows, _LANES), lambda i: (i, 0)),   # logits tile
            pl.BlockSpec((tile_rows, _LANES), lambda i: (i, 0)),   # targets tile
        ],
        # Each grid step owns its own lane-dense partial-sum block -> the grid
        # axis is independent ("parallel"): v7x can split it across both TCs.
        out_specs=pl.BlockSpec((1, 1, _LANES), lambda i: (i, 0, 0)),
        compiler_params=pltpu.CompilerParams(
            dimension_semantics=("parallel",),
            vmem_limit_bytes=32 * 1024 * 1024,  # explicit: covers v5e's 16 MiB default
        ),
    )(x2, t2)

    return jnp.sum(partials) / jnp.float32(n_total)


def _reference(inputs, targets, alpha=ALPHA, gamma=GAMMA):
    """Pure-JAX reference, same math as the PyTorch forward."""
    x = inputs.astype(jnp.float32)
    t = targets.astype(jnp.float32)
    bce = jnp.maximum(x, 0.0) - x * t + jnp.log1p(jnp.exp(-jnp.abs(x)))
    at = jnp.where(t > 0.5, 1.0 - alpha, alpha)
    pt = jnp.exp(-bce)
    return jnp.mean(at * (1.0 - pt) ** gamma * bce)


def _close(a, b):
    return abs(float(a) - float(b)) < 1e-4 + 2e-3 * abs(float(b))


if __name__ == "__main__":
    key = jax.random.PRNGKey(0)
    k1, k2, k3, k4 = jax.random.split(key, 4)

    # Case 1: unaligned length (N=5000 -> padded + masked), bf16 targets, and a
    # forced small tile so the "parallel" multi-tile grid path is exercised.
    n1 = 5000
    x1 = jax.random.normal(k1, (n1,), dtype=jnp.float32)                 # logits
    t1 = (jax.random.uniform(k2, (n1,)) > 0.5).astype(jnp.bfloat16)      # 0/1 labels
    loss1 = jax.block_until_ready(weighted_focal_loss(x1, t1, max_tile_rows=16))
    ref1 = _reference(x1, t1)
    assert _close(loss1, ref1), (float(loss1), float(ref1))

    # Case 2: tile-aligned length with the default (large-tile) configuration.
    n2 = 2048
    x2 = jax.random.normal(k3, (n2,), dtype=jnp.float32)
    t2 = (jax.random.uniform(k4, (n2,)) > 0.5).astype(jnp.float32)
    loss2 = jax.block_until_ready(weighted_focal_loss(x2, t2))
    ref2 = _reference(x2, t2)
    assert _close(loss2, ref2), (float(loss2), float(ref2))

    print("KERNEL_OK")
</pallas_src>

<mosaic_0001>
module attributes {stable_mosaic.version = 11 : i64} {
  func.func @_focal_loss_kernel(%arg0: i32, %arg1: memref<16x128xf32, #tpu.memory_space<vmem>>, %arg2: memref<16x128xbf16, #tpu.memory_space<vmem>>, %arg3: memref<1x1x128xf32, #tpu.memory_space<vmem>>) attributes {dimension_semantics = [#tpu.dimension_semantics<parallel>], iteration_bounds = array<i64: 3>, scalar_prefetch = 0 : i64, scratch_operands = 0 : i64, tpu.core_type = #tpu.core_type<tc>, window_params = [{transform_indices = @transform_0, window_bounds = array<i64: 16, 128>}, {transform_indices = @transform_1, window_bounds = array<i64: 16, 128>}, {transform_indices = @transform_2, window_bounds = array<i64: 1, 1, 128>}]} {
    %c0 = arith.constant 0 : index
    %c0_0 = arith.constant 0 : index
    %0 = vector.load %arg1[%c0, %c0_0] : memref<16x128xf32, #tpu.memory_space<vmem>>, vector<16x128xf32>
    %c0_1 = arith.constant 0 : index
    %c0_2 = arith.constant 0 : index
    %1 = vector.load %arg2[%c0_1, %c0_2] : memref<16x128xbf16, #tpu.memory_space<vmem>>, vector<16x128xbf16>
    %2 = arith.extf %1 : vector<16x128xbf16> to vector<16x128xf32>
    %3 = math.absf %0 : vector<16x128xf32>
    %cst = arith.constant 0.000000e+00 : f32
    %4 = vector.broadcast %cst : f32 to vector<16x128xf32>
    %5 = arith.subf %4, %3 : vector<16x128xf32>
    %6 = math.exp %5 : vector<16x128xf32>
    %cst_3 = arith.constant 0.000000e+00 : f32
    %7 = vector.broadcast %cst_3 : f32 to vector<16x128xf32>
    %8 = arith.maximumf %0, %7 : vector<16x128xf32>
    %9 = arith.mulf %0, %2 : vector<16x128xf32>
    %10 = arith.subf %8, %9 : vector<16x128xf32>
    %11 = math.log1p %6 : vector<16x128xf32>
    %12 = arith.addf %10, %11 : vector<16x128xf32>
    %cst_4 = arith.constant 5.000000e-01 : f32
    %13 = vector.broadcast %cst_4 : f32 to vector<16x128xf32>
    %14 = arith.cmpf ogt, %2, %13 : vector<16x128xf32>
    %cst_5 = arith.constant 0.000000e+00 : f32
    %15 = vector.broadcast %cst_5 : f32 to vector<16x128xf32>
    %16 = arith.subf %15, %0 : vector<16x128xf32>
    %17 = arith.select %14, %0, %16 : vector<16x128xi1>, vector<16x128xf32>
    %cst_6 = arith.constant 0.000000e+00 : f32
    %18 = vector.broadcast %cst_6 : f32 to vector<16x128xf32>
    %19 = arith.cmpf oge, %17, %18 : vector<16x128xf32>
    %cst_7 = arith.constant 1.000000e+00 : f32
    %20 = vector.broadcast %cst_7 : f32 to vector<16x128xf32>
    %21 = arith.select %19, %20, %6 : vector<16x128xi1>, vector<16x128xf32>
    %cst_8 = arith.constant 1.000000e+00 : f32
    %22 = vector.broadcast %cst_8 : f32 to vector<16x128xf32>
    %23 = arith.addf %22, %6 : vector<16x128xf32>
    %24 = tpu.reciprocal %23 {approx = true} : vector<16x128xf32> -> vector<16x128xf32>
    %25 = arith.mulf %21, %24 : vector<16x128xf32>
    %cst_9 = arith.constant 5.000000e-01 : f32
    %26 = vector.broadcast %cst_9 : f32 to vector<16x128xf32>
    %27 = arith.mulf %26, %2 : vector<16x128xf32>
    %cst_10 = arith.constant 2.500000e-01 : f32
    %28 = vector.broadcast %cst_10 : f32 to vector<16x128xf32>
    %29 = arith.addf %28, %27 : vector<16x128xf32>
    %cst_11 = arith.constant 1.000000e+00 : f32
    %30 = vector.broadcast %cst_11 : f32 to vector<16x128xf32>
    %31 = arith.subf %30, %25 : vector<16x128xf32>
    %32 = arith.mulf %31, %31 : vector<16x128xf32>
    %33 = arith.mulf %29, %32 : vector<16x128xf32>
    %34 = arith.mulf %33, %12 : vector<16x128xf32>
    %35 = tpu.iota {dimensions = array<i32: 0>} : vector<16x128xi32>
    %36 = tpu.iota {dimensions = array<i32: 1>} : vector<16x128xi32>
    %c16_i32 = arith.constant 16 : i32
    %37 = arith.muli %arg0, %c16_i32 : i32
    %38 = vector.broadcast %37 : i32 to vector<16x128xi32>
    %39 = arith.addi %38, %35 : vector<16x128xi32>
    %c128_i32 = arith.constant 128 : i32
    %40 = vector.broadcast %c128_i32 : i32 to vector<16x128xi32>
    %41 = arith.muli %39, %40 : vector<16x128xi32>
    %42 = arith.addi %41, %36 : vector<16x128xi32>
    %c5000_i32 = arith.constant 5000 : i32
    %43 = vector.broadcast %c5000_i32 : i32 to vector<16x128xi32>
    %44 = arith.cmpi slt, %42, %43 : vector<16x128xi32>
    %cst_12 = arith.constant 0.000000e+00 : f32
    %45 = vector.broadcast %cst_12 : f32 to vector<16x128xf32>
    %46 = arith.select %44, %34, %45 : vector<16x128xi1>, vector<16x128xf32>
    %cst_13 = arith.constant dense<0.000000e+00> : vector<128xf32>
    %47 = vector.multi_reduction <add>, %46, %cst_13 [0] : vector<16x128xf32> to vector<128xf32>
    %48 = vector.shape_cast %47 : vector<128xf32> to vector<1x1x128xf32>
    %c0_14 = arith.constant 0 : index
    %c0_15 = arith.constant 0 : index
    %c0_16 = arith.constant 0 : index
    %49 = vector.load %arg3[%c0_14, %c0_15, %c0_16] : memref<1x1x128xf32, #tpu.memory_space<vmem>>, vector<1x1x128xf32>
    tpu.vector_store %arg3[%c0_14, %c0_15, %c0_16], %48 {strides = array<i32>} : memref<1x1x128xf32, #tpu.memory_space<vmem>>, vector<1x1x128xf32>,
    return
  }
  func.func @transform_0(%arg0: i32) -> (i32, i32) {
    %c0_i32 = arith.constant 0 : i32
    %c0_i32_0 = arith.constant 0 : i32
    return %arg0, %c0_i32 : i32, i32
  }
  func.func @transform_1(%arg0: i32) -> (i32, i32) {
    %c0_i32 = arith.constant 0 : i32
    %c0_i32_0 = arith.constant 0 : i32
    return %arg0, %c0_i32 : i32, i32
  }
  func.func @transform_2(%arg0: i32) -> (i32, i32, i32) {
    %c0_i32 = arith.constant 0 : i32
    %c0_i32_0 = arith.constant 0 : i32
    %c0_i32_1 = arith.constant 0 : i32
    return %arg0, %c0_i32, %c0_i32_0 : i32, i32, i32
  }
}

</mosaic_0001>

<llo_original>
// kernel: tpu_custom_call.1
$region0: #{tpu_custom_call.1}
  #allocation0 [shape = 'u32[]', space=smem, size = 0x4, offset = 0x4, fixed_abs, tag = 'smem constant byte address 0x4 - core index']
  #allocation1 [shape = 'u32[144,128]{1,0:T(1,128)}', space=vmem, size = 0x12000, scoped, tag = 'internal scratch']
  %s0 = inlined_call_operand.hbm [shape: f32[40,128], index: 0, kind: input, shape index: {}]
  %s1 = inlined_call_operand.hbm [shape: bf16[40,128], index: 1, kind: input, shape index: {}]
  %s2 = inlined_call_operand.hbm [shape: f32[3,1,128], index: 2, kind: output, shape index: {}]
  %s3 = sld [smem:[#allocation0]]
  $region49: #{tpu_custom_call.1} parent=0
    _
  %s5 = ssub.s32 1, %s3
  %s6 = scalar_select 0, %s5, %s3
  $region1: #{tpu_custom_call.1} parent=0
    #allocation2 [shape = 'u8[16384]{0}', space=vmem, size = 0x4000, scoped, tag = 'input window, operand 0']
    #allocation3 [shape = 's32[2]{0}', space=sflag, size = 0x8, scoped, tag = 'scoped memory for tpu_custom_call.1']
    #allocation4 [shape = 's32[2]{0}', space=sflag, size = 0x8, scoped, tag = 'scoped memory for tpu_custom_call.1']
    #allocation5 [shape = 'u8[8192]{0}', space=vmem, size = 0x2000, scoped, tag = 'input window, operand 1']
    #allocation6 [shape = 's32[2]{0}', space=sflag, size = 0x8, scoped, tag = 'scoped memory for tpu_custom_call.1']
    #allocation7 [shape = 'u8[1024]{0}', space=vmem, size = 0x400, scoped, tag = 'output window, operand 0']
    %7 = vsyncpa [#allocation3], 0
    %s8 = scalar_lea.sflag [#allocation3], 1
    %9 = vsyncpa %s8, 0
    %10 = vsyncpa [#allocation6], 0
    %s11 = scalar_lea.sflag [#allocation6], 1
    %12 = vsyncpa %s11, 0
    %13 = vsyncpa [#allocation4], 0
    %s14 = scalar_lea.sflag [#allocation4], 1
    %15 = vsyncpa %s14, 0
    loop: start=0, step=1, limit=5
    $region2: #{tpu_custom_call.1} parent=1 // loop_pre_header
      _
    $region3: #{tpu_custom_call.1} parent=1 // loop_header
      %s17 = sphi 0, %s21
      %p18 = scmp.ge.s32.totalorder %s17, 5
      %s27 = sphi 0, %s29
      %s30 = sphi 0, %s27
      %s31 = sphi 0, %s30
      %s47 = sphi 0, %s31
      %s53 = sphi 0, %s55
      %s56 = sphi 0, %s53
      %s57 = sphi 0, %s56
      %s73 = sphi 0, %s57
      %s79 = sphi 0, %s81
      %s82 = sphi 0, %s79
      %s83 = sphi 0, %s82
      %s99 = sphi 0, %s83
    $region4: #{tpu_custom_call.1} parent=1 // loop_header_branch
      %20 = sbr.rel (%p18) target = $region8
    $region5: #{tpu_custom_call.1} parent=1 // loop_body
      %s22 = ssub.s32 %s17, 1
      %s23 = ssub.s32 %s17, 2
      %s24 = sadd.s32 %s17, 1
      %s25 = ssub.s32 %s17, %s24
      %p26 = scmp.eq.s32.totalorder %s25, 0
      %s28 = sadd.s32 %s27, 1
      %s29 = scalar_select %p26, %s27, %s28
      %p32 = pneg %p26
      %p33 = scmp.eq.s32.totalorder %s17, 2
      %p34 = por %p32, %p33
      %p35 = scmp.ne.s32.totalorder %s27, %s30
      %p36 = scmp.eq.s32.totalorder %s17, 0
      %p37 = por %p35, %p36
      %p38 = scmp.ne.s32.totalorder %s27, %s30
      %p39 = scmp.eq.s32.totalorder %s22, 2
      %p40 = por %p38, %p39
      %p41 = scmp.ne.s32.totalorder %s30, %s31
      %p42 = scmp.eq.s32.totalorder %s22, 0
      %p43 = por %p41, %p42
      %p44 = scmp.ne.s32.totalorder %s30, %s31
      %p45 = scmp.eq.s32.totalorder %s23, 2
      %p46 = por %p44, %p45
      %p48 = scmp.ne.s32.totalorder %s31, %s47
      %p49 = scmp.eq.s32.totalorder %s23, 0
      %p50 = por %p48, %p49
      %s51 = ssub.s32 %s17, %s24
      %p52 = scmp.eq.s32.totalorder %s51, 0
      %s54 = sadd.s32 %s53, 1
      %s55 = scalar_select %p52, %s53, %s54
      %p58 = pneg %p52
      %p59 = scmp.eq.s32.totalorder %s17, 2
      %p60 = por %p58, %p59
      %p61 = scmp.ne.s32.totalorder %s53, %s56
      %p62 = scmp.eq.s32.totalorder %s17, 0
      %p63 = por %p61, %p62
      %p64 = scmp.ne.s32.totalorder %s53, %s56
      %p65 = scmp.eq.s32.totalorder %s22, 2
      %p66 = por %p64, %p65
      %p67 = scmp.ne.s32.totalorder %s56, %s57
      %p68 = scmp.eq.s32.totalorder %s22, 0
      %p69 = por %p67, %p68
      %p70 = scmp.ne.s32.totalorder %s56, %s57
      %p71 = scmp.eq.s32.totalorder %s23, 2
      %p72 = por %p70, %p71
      %p74 = scmp.ne.s32.totalorder %s57, %s73
      %p75 = scmp.eq.s32.totalorder %s23, 0
      %p76 = por %p74, %p75
      %s77 = ssub.s32 %s17, %s24
      %p78 = scmp.eq.s32.totalorder %s77, 0
      %s80 = sadd.s32 %s79, 1
      %s81 = scalar_select %p78, %s79, %s80
      %p84 = pneg %p78
      %p85 = scmp.eq.s32.totalorder %s17, 2
      %p86 = por %p84, %p85
      %p87 = scmp.ne.s32.totalorder %s79, %s82
      %p88 = scmp.eq.s32.totalorder %s17, 0
      %p89 = por %p87, %p88
      %p90 = scmp.ne.s32.totalorder %s79, %s82
      %p91 = scmp.eq.s32.totalorder %s22, 2
      %p92 = por %p90, %p91
      %p93 = scmp.ne.s32.totalorder %s82, %s83
      %p94 = scmp.eq.s32.totalorder %s22, 0
      %p95 = por %p93, %p94
      %p96 = scmp.ne.s32.totalorder %s82, %s83
      %p97 = scmp.eq.s32.totalorder %s23, 2
      %p98 = por %p96, %p97
      %p100 = scmp.ne.s32.totalorder %s83, %s99
      %p101 = scmp.eq.s32.totalorder %s23, 0
      %p102 = por %p100, %p101
      %p103 = scmp.le.s32.totalorder 1, %s17
      %p104 = scmp.lt.s32.totalorder %s17, 4
      %p105 = pnand %p103, %p104
      %p106 = pneg %p105
      // Predicated region
      $region9: #{tpu_custom_call.1} parent=5 // pred_check
        _
      $region10: #{tpu_custom_call.1} parent=5 // pred_check_branch
        %108 = sbr.rel (%p105) target = $region12
      $region11: #{tpu_custom_call.1} parent=5 // pred_region
        %s109 = ssub.s32 %s17, 1
      $region12: #{tpu_custom_call.1} parent=5 // pred_fallthru
        _
      %p110 = scmp.lt.s32.totalorder %s17, 3
      // Predicated region
      $region13: #{tpu_custom_call.1} parent=5 // pred_check
        %p111 = pneg %p110
      $region14: #{tpu_custom_call.1} parent=5 // pred_check_branch
        %113 = sbr.rel (%p111) target = $region16
      $region15: #{tpu_custom_call.1} parent=5 // pred_region
        // Predicated region
        $region17: #{tpu_custom_call.1} parent=15 // pred_check
          %p114 = pneg %p37
        $region18: #{tpu_custom_call.1} parent=15 // pred_check_branch
          %116 = sbr.rel (%p114) target = $region20
        $region19: #{tpu_custom_call.1} parent=15 // pred_region
          %s117 = sand.u32 %s27, 1
          %s118 = scalar_lea.sflag [#allocation3], %s117
          %s119 = sand.u32 %s27, 1
          %s120 = smul.addr %s119, 16
          %s121 = scalar_lea.vmem [#allocation2], %s120
          %s122 = smul.u32 2, %s17
          %s123 = ssub.s32 5, %s122
          %p124 = scmp.lt.s32.totalorder %s123, 2
          %s125 = scalar_select %p124, %s123, 2
          %s126 = smul.u32 128, %s125
          %s128 = ssub.s32 256, %s126
          %129 = vsyncadd %s118, %s128
          %p130 = scmp.ne.s32.totalorder 0, %s126
          %s131 = smul.addr %s122, 128
          %s132 = scalar_lea.hbm %s0, %s131
          %s133 = smul.u32 8, %s125
          %s134 = sshll.u32 %s121, 4
          %s135 = int_to_ptr.vmem [resolvable:$true] %s134
          %s136 = sshll.u32 %s133, 4
          %140 = dma.hbm_to_vmem [thread:$0]  (%p130), %s132, %s136, %s135, %s118, 128, 128, 8
        $region20: #{tpu_custom_call.1} parent=15 // pred_fallthru
          _
        // Predicated region
        $region21: #{tpu_custom_call.1} parent=15 // pred_check
          %p141 = pneg %p63
        $region22: #{tpu_custom_call.1} parent=15 // pred_check_branch
          %143 = sbr.rel (%p141) target = $region24
        $region23: #{tpu_custom_call.1} parent=15 // pred_region
          %s144 = sand.u32 %s53, 1
          %s145 = scalar_lea.sflag [#allocation6], %s144
          %s146 = sand.u32 %s53, 1
          %s147 = smul.addr %s146, 8
          %s148 = scalar_lea.vmem [#allocation5], %s147
          %s149 = smul.u32 2, %s17
          %s150 = ssub.s32 5, %s149
          %p151 = scmp.lt.s32.totalorder %s150, 2
          %s152 = scalar_select %p151, %s150, 2
          %s153 = smul.u32 64, %s152
          %s155 = ssub.s32 128, %s153
          %156 = vsyncadd %s145, %s155
          %p157 = scmp.ne.s32.totalorder 0, %s153
          %s158 = smul.addr %s149, 64
          %s159 = scalar_lea.hbm %s1, %s158
          %s160 = smul.u32 4, %s152
          %s161 = sshll.u32 %s148, 4
          %s162 = int_to_ptr.vmem [resolvable:$true] %s161
          %s163 = sshll.u32 %s160, 4
          %167 = dma.hbm_to_vmem [thread:$0]  (%p157), %s159, %s163, %s162, %s145, 64, 64, 4
        $region24: #{tpu_custom_call.1} parent=15 // pred_fallthru
          _
      $region16: #{tpu_custom_call.1} parent=5 // pred_fallthru
        _
      %p168 = scmp.le.s32.totalorder 1, %s17
      %p169 = scmp.lt.s32.totalorder %s17, 4
      %p170 = pnand %p168, %p169
      %p171 = pneg %p170
      // Predicated region
      $region25: #{tpu_custom_call.1} parent=5 // pred_check
        _
      $region26: #{tpu_custom_call.1} parent=5 // pred_check_branch
        %173 = sbr.rel (%p170) target = $region28
      $region27: #{tpu_custom_call.1} parent=5 // pred_region
        %s174 = ssub.s32 %s17, 1
        %s175 = sand.u32 %s30, 1
        %s176 = scalar_lea.sflag [#allocation3], %s175
        %s177 = sand.u32 %s30, 1
        %s178 = smul.addr %s177, 16
        %s179 = scalar_lea.vmem [#allocation2], %s178
        // Predicated region
        $region29: #{tpu_custom_call.1} parent=27 // pred_check
          %p180 = pneg %p43
        $region30: #{tpu_custom_call.1} parent=27 // pred_check_branch
          %182 = sbr.rel (%p180) target = $region32
        $region31: #{tpu_custom_call.1} parent=27 // pred_region
          %183 = dma.done %s176, 256
        $region32: #{tpu_custom_call.1} parent=27 // pred_fallthru
          _
        %s184 = sand.u32 %s56, 1
        %s185 = scalar_lea.sflag [#allocation6], %s184
        %s186 = sand.u32 %s56, 1
        %s187 = smul.addr %s186, 8
        %s188 = scalar_lea.vmem [#allocation5], %s187
        // Predicated region
        $region33: #{tpu_custom_call.1} parent=27 // pred_check
          %p189 = pneg %p69
        $region34: #{tpu_custom_call.1} parent=27 // pred_check_branch
          %191 = sbr.rel (%p189) target = $region36
        $region35: #{tpu_custom_call.1} parent=27 // pred_region
          %192 = dma.done %s185, 128
        $region36: #{tpu_custom_call.1} parent=27 // pred_fallthru
          _
        %s193 = sand.u32 %s30, 1
        %s194 = scalar_lea.sflag [#allocation3], %s193
        %s195 = sand.u32 %s30, 1
        %s196 = smul.addr %s195, 16
        %s197 = scalar_lea.vmem [#allocation2], %s196
        %p198 = pneg %p43
        %p199 = pneg %p40
        %s200 = sand.u32 %s56, 1
        %s201 = scalar_lea.sflag [#allocation6], %s200
        %s202 = sand.u32 %s56, 1
        %s203 = smul.addr %s202, 8
        %s204 = scalar_lea.vmem [#allocation5], %s203
        %p205 = pneg %p69
        %p206 = pneg %p66
        %p207 = pneg %p95
        %p208 = pneg %p92
        %s209 = sand.u32 %s82, 1
        %s210 = scalar_lea.sflag [#allocation4], %s209
        %s211 = sand.u32 %s82, 1
        %s212 = scalar_lea.vmem [#allocation7], %s211
        %s213 = smul.u32 2, %s22
        %s214 = ssub.s32 5, %s213
        %p215 = scmp.lt.s32.totalorder %s214, 2
        %s216 = scalar_select %p215, %s214, 2
        %s217 = smul.u32 128, %s216
        %s218 = smul.u32 2, %s22
        %s219 = ssub.s32 5, %s218
        %p220 = scmp.lt.s32.totalorder %s219, 2
        %s221 = scalar_select %p220, %s219, 2
        %s222 = smul.u32 64, %s221
        %v223 = vld [vmem:[%s179] sm:$0xff]
        %v224 = vld [vmem:[%s179 + $0x8] sm:$0xff]
        %v225 = vld [vmem:[%s188] sm:$0xf]
        %v226 = vld [vmem:[%s188 + $0x4] sm:$0xf]
        %v227 = vunpack.c.l.bf16 %v225
        %v228 = vunpack.c.l.bf16 %v226
        %v229 = vand.u32 2147483647, %v223
        %v230 = vand.u32 2147483647, %v224
        %v231 = vsub.f32 0.0, %v229
        %v232 = vsub.f32 0.0, %v230
        %v233 = vmul.f32 %v231, 1.442695
        %v234 = vpow.pop %v233
        %v235 = vmul.f32 %v232, 1.442695
        %v236 = vpow.pop %v235
        %v237 = vmax.f32 %v223, 0.0
        %v238 = vmax.f32 %v224, 0.0
        %v239 = vmul.f32 %v223, %v227
        %v240 = vmul.f32 %v224, %v228
        %v241 = vsub.f32 %v237, %v239
        %v242 = vsub.f32 %v238, %v240
        %v243 = vadd.f32 %v234, 1.0
        %v244 = vlog2.pop %v243
        %v245 = vmul.f32 %v244, 0.6931472
        %v246 = vmul.f32 -0.5, %v234
        %v247 = vadd.f32 %v246, 1.0
        %v248 = vmul.f32 %v247, %v234
        %v249 = vand.u32 2147483647, %v234
        %vm250 = vcmp.lt.f32.partialorder %v249, 0.0004427343
        %v251 = vsel %vm250, %v248, %v245
        %v252 = vadd.f32 %v236, 1.0
        %v253 = vlog2.pop %v252
        %v254 = vmul.f32 %v253, 0.6931472
        %v255 = vmul.f32 -0.5, %v236
        %v256 = vadd.f32 %v255, 1.0
        %v257 = vmul.f32 %v256, %v236
        %v258 = vand.u32 2147483647, %v236
        %vm259 = vcmp.lt.f32.partialorder %v258, 0.0004427343
        %v260 = vsel %vm259, %v257, %v254
        %v261 = vadd.f32 %v241, %v251
        %v262 = vadd.f32 %v242, %v260
        %vm263 = vcmp.gt.f32.partialorder %v227, 0.5
        %vm264 = vcmp.gt.f32.partialorder %v228, 0.5
        %v265 = vsub.f32 0.0, %v223
        %v266 = vsub.f32 0.0, %v224
        %v267 = vsel %vm263, %v223, %v265
        %v268 = vsel %vm264, %v224, %v266
        %vm269 = vcmp.ge.f32.partialorder %v267, 0.0
        %vm270 = vcmp.ge.f32.partialorder %v268, 0.0
        %v271 = vsel %vm269, 1.0, %v234
        %v272 = vsel %vm270, 1.0, %v236
        %v273 = vadd.f32 %v234, 1.0
        %v274 = vadd.f32 %v236, 1.0
        %v275 = vrcp.pop %v273
        %v276 = vrcp.pop %v274
        %v277 = vmul.f32 %v271, %v275
        %v278 = vmul.f32 %v272, %v276
        %v279 = vmul.f32 %v227, 0.5
        %v280 = vmul.f32 %v228, 0.5
        %v281 = vadd.f32 %v279, 0.25
        %v282 = vadd.f32 %v280, 0.25
        %v283 = vsub.f32 1.0, %v277
        %v284 = vsub.f32 1.0, %v278
        %v285 = vmul.f32 %v283, %v283
        %v286 = vmul.f32 %v284, %v284
        %v287 = vmul.f32 %v281, %v285
        %v288 = vmul.f32 %v282, %v286
        %v289 = vmul.f32 %v287, %v261
        %v290 = vmul.f32 %v288, %v262
        %v291 = vlaneseq
        %v292 = vshrl.u32 %v291, 7
        %v293 = vadd.s32 %v292, 8
        %v294 = vlaneseq
        %v295 = vand.u32 %v294, 127
        %s296 = smul.u32 %s22, 16
        %v297 = vstv %s296
        %v298 = vadd.s32 %v297, %v292
        %v299 = vadd.s32 %v297, %v293
        %v300 = vmul.u32 %v298, 128
        %v301 = vmul.u32 %v299, 128
        %v302 = vadd.s32 %v300, %v295
        %v303 = vadd.s32 %v301, %v295
        %vm304 = vcmp.lt.s32.totalorder %v302, 5000
        %vm305 = vcmp.lt.s32.totalorder %v303, 5000
        %v306 = vsel %vm304, %v289, 0.0
        %v307 = vsel %vm305, %v290, 0.0
        %v308 = vadd.f32 %v306, %v307
        %v309 = vrot.slane %v308, 4
        %v310 = vadd.f32 %v308, %v309
        %v311 = vrot.slane %v310, 2
        %v312 = vadd.f32 %v310, %v311
        %v313 = vrot.slane %v312, 1
        %v314 = vadd.f32 %v312, %v313
        %315 = vst [vmem:[%s212] sm:$0x1] %v314
        %s316 = sand.u32 %s82, 1
        %s317 = scalar_lea.sflag [#allocation4], %s316
        %s318 = sand.u32 %s82, 1
        %s319 = scalar_lea.vmem [#allocation7], %s318
        // Predicated region
        $region37: #{tpu_custom_call.1} parent=27 // pred_check
          %p320 = pneg %p92
        $region38: #{tpu_custom_call.1} parent=27 // pred_check_branch
          %322 = sbr.rel (%p320) target = $region40
        $region39: #{tpu_custom_call.1} parent=27 // pred_region
          %s324 = ssub.s32 16, 16
          %325 = vsyncadd %s317, %s324
          %s326 = smul.addr %s22, 16
          %s327 = scalar_lea.hbm %s2, %s326
          %s329 = sshll.u32 %s319, 4
          %s330 = int_to_ptr.vmem [resolvable:$true] %s329
          %332 = dma.vmem_to_hbm [thread:$0]  %s330, 16, %s327, %s317
        $region40: #{tpu_custom_call.1} parent=27 // pred_fallthru
          _
      $region28: #{tpu_custom_call.1} parent=5 // pred_fallthru
        _
      %p333 = scmp.le.s32.totalorder 2, %s17
      // Predicated region
      $region41: #{tpu_custom_call.1} parent=5 // pred_check
        %p334 = pneg %p333
      $region42: #{tpu_custom_call.1} parent=5 // pred_check_branch
        %336 = sbr.rel (%p334) target = $region44
      $region43: #{tpu_custom_call.1} parent=5 // pred_region
        %s337 = ssub.s32 %s17, 2
        // Predicated region
        $region45: #{tpu_custom_call.1} parent=43 // pred_check
          %p338 = pneg %p98
        $region46: #{tpu_custom_call.1} parent=43 // pred_check_branch
          %340 = sbr.rel (%p338) target = $region48
        $region47: #{tpu_custom_call.1} parent=43 // pred_region
          %s341 = sand.u32 %s83, 1
          %s342 = scalar_lea.sflag [#allocation4], %s341
          %s343 = sand.u32 %s83, 1
          %s344 = scalar_lea.vmem [#allocation7], %s343
          %345 = dma.done %s342, 16
        $region48: #{tpu_custom_call.1} parent=43 // pred_fallthru
          _
      $region44: #{tpu_custom_call.1} parent=5 // pred_fallthru
        _
    $region6: #{tpu_custom_call.1} parent=1 // loop_footer
      %s21 = sadd.s32 1, %s17
    $region7: #{tpu_custom_call.1} parent=1 // loop_footer_branch
      %16 = sbr.rel target = $region3
    $region8: #{tpu_custom_call.1} parent=1 // loop_exit
      _
    %346 = vsyncpa [#allocation3], 1
    %s347 = scalar_lea.sflag [#allocation3], 1
    %348 = vsyncpa %s347, 1
    %349 = vsyncpa [#allocation6], 1
    %s350 = scalar_lea.sflag [#allocation6], 1
    %351 = vsyncpa %s350, 1
    %352 = vsyncpa [#allocation4], 1
    %s353 = scalar_lea.sflag [#allocation4], 1
    %354 = vsyncpa %s353, 1

</llo_original>
